<compile_context>
chip_gen: v5e
topology: v5e:2x2
jax: 0.10.0
libtpu: 0.0.40
codegen_flags: <defaults>
</compile_context>

<pallas_src>
import math

import jax
import jax.numpy as jnp
from jax import lax
from jax.experimental import pallas as pl
from jax.experimental.pallas import tpu as pltpu

_LN_EPS = 1e-5              # torch.nn.LayerNorm default eps
_WEIGHT_DTYPE = jnp.bfloat16  # MXU operand dtype for weights (f32 accumulation)


def _use_approx_gelu():
    """tanh-approx GELU only on v5e (erf polynomial is pure VALU cost there)."""
    try:
        kind = jax.devices()[0].device_kind.lower()
    except Exception:
        return False
    return ("v5e" in kind) or ("v5 lite" in kind) or ("v5lite" in kind)


def _vmem_capacity_bytes():
    """Per-core VMEM capacity (64 MiB on v7x, 128 MiB on v5e/v6e)."""
    try:
        cap = getattr(pltpu.get_tpu_info(), "vmem_capacity_bytes", None)
        if cap:
            return int(cap)
    except Exception:
        pass
    return 64 * 2**20   # conservative fallback (fits every generation)


def _padded_bytes(shape, itemsize):
    """VMEM footprint of an array, padded to the native (8, 128) tiling."""
    shape = tuple(shape)
    if len(shape) == 1:
        shape = (1,) + shape
    *lead, sub, lane = shape
    sub_p = -(-sub // 8) * 8
    lane_p = -(-lane // 128) * 128
    n = 1
    for d in lead:
        n *= d
    return n * sub_p * lane_p * itemsize


def _make_mixer_kernel(use_approx_gelu):
    inv_sqrt2 = 1.0 / math.sqrt(2.0)

    def gelu(h):
        if use_approx_gelu:
            # tanh approximation runs on the EUP (separate, otherwise-idle slot).
            return jax.nn.gelu(h, approximate=True)
        return 0.5 * h * (1.0 + lax.erf(h * inv_sqrt2))

    def kernel(x_ref,
               trow_ref, tb1_ref, tw1_ref, tw2_ref,     # time-mix params
               fcol_ref, fb1_ref, fw1t_ref, fw2t_ref,   # freq-mix params
               o_ref):
        """Fused time-mix + freq-mix (+ residuals) for a (TB, F, T) block."""
        TB, F, T = x_ref.shape
        Hf = fw1t_ref.shape[0]

        x = x_ref[...].astype(jnp.float32)               # (TB, F, T)

        # Loop-invariant params.  Weights arrive pre-cast to bf16 from the
        # wrapper; LN/bias params stay f32 (astype is a no-op for f32 inputs).
        trow = trow_ref[...].astype(jnp.float32)         # (3, T): gamma, beta, b2
        tg, tbt, tb2 = trow[0:1], trow[1:2], trow[2:3]
        tb1 = tb1_ref[...].astype(jnp.float32)           # (1, Ht)
        tw1 = tw1_ref[...]                               # (T, Ht)  bf16
        tw2 = tw2_ref[...]                               # (Ht, T)  bf16

        fcol = fcol_ref[...].astype(jnp.float32)         # (F, 3): gamma, beta, b2
        fg, fbt, fb2 = fcol[:, 0:1], fcol[:, 1:2], fcol[:, 2:3]
        fb1 = fb1_ref[...].astype(jnp.float32)           # (Hf, 1)
        fw1t = fw1t_ref[...]                             # (Hf, F)  bf16 (= W1_f^T)
        fw2t = fw2t_ref[...]                             # (F, Hf)  bf16 (= W2_f^T)

        # ---- time mix on the merged (TB*F, T) view: LayerNorm(T) + FFN ----
        # (relayout-free merge when F % 8 == 0; correct regardless)
        xm = x.reshape(TB * F, T)
        mean = jnp.mean(xm, axis=-1, keepdims=True)
        var = jnp.mean(jnp.square(xm - mean), axis=-1, keepdims=True)
        xn = (xm - mean) * lax.rsqrt(var + _LN_EPS) * tg + tbt
        h = jnp.dot(xn.astype(tw1.dtype), tw1,
                    preferred_element_type=jnp.float32) + tb1
        h = gelu(h)
        y = jnp.dot(h.astype(tw2.dtype), tw2,
                    preferred_element_type=jnp.float32) + tb2
        x = x + y.reshape(TB, F, T)                       # x + time_mix(x)

        # ---- freq mix: LayerNorm(F) + FFN(F,Hf,F), batched over the block's
        #      samples; contracts the sublane (F) axis via pre-transposed
        #      weights, so no transpose ever touches HBM or VMEM. ----
        mean = jnp.mean(x, axis=1, keepdims=True)         # (TB, 1, T)
        var = jnp.mean(jnp.square(x - mean), axis=1, keepdims=True)
        fn = (x - mean) * lax.rsqrt(var + _LN_EPS) * fg + fbt
        w1b = jnp.broadcast_to(fw1t, (TB, Hf, F))
        hf = jnp.einsum("bhf,bft->bht", w1b, fn.astype(fw1t.dtype),
                        preferred_element_type=jnp.float32) + fb1
        hf = gelu(hf)
        w2b = jnp.broadcast_to(fw2t, (TB, F, Hf))
        yf = jnp.einsum("bfh,bht->bft", w2b, hf.astype(fw2t.dtype),
                        preferred_element_type=jnp.float32) + fb2

        o_ref[...] = (x + yf).astype(o_ref.dtype)         # + freq_mix residual

    return kernel


def mixer_block(x, params, *, interpret=False):
    """x: (B, freq_dim, time_dim) -> same shape, matching MixerBlock.forward."""
    B, F, T = x.shape
    tp, fp = params["time"], params["freq"]
    Ht = tp["w1"].shape[1]
    Hf = fp["w1"].shape[1]
    itemsize = jnp.dtype(x.dtype).itemsize

    # ---- generation-aware batch-tile selection ----
    vmem_cap = _vmem_capacity_bytes()
    io_budget = max(8 * 2**20, vmem_cap // 4)   # ~32 MiB on v5e/v6e, ~16 MiB on v7x
    slab_io = _padded_bytes((1, F, T), itemsize)
    slab_f32 = _padded_bytes((1, F, T), 4)
    # dbl-buffered (in + out) blocks plus ~6 live f32 intermediates per sample.
    per_sample = 4 * slab_io + 6 * slab_f32
    tb_budget = max(1, io_budget // per_sample)
    tb_steps = max(1, -(-B // 4))               # keep >= ~4 grid steps (megacore/pipeline)
    TB = int(max(1, min(B, tb_budget, tb_steps)))
    grid = (pl.cdiv(B, TB),)

    # ---- kernel-friendly parameter packing (tiny host-side ops) ----
    #   time params broadcast along rows  -> packed (3, T) row slab + (1, Ht)
    #   freq params act along the sublane -> packed (F, 3) column slab, (Hf, 1),
    #   and transposed weights; weights pre-cast to bf16 once, wrapper-side.
    trow = jnp.concatenate(
        [tp["gamma"].reshape(1, T), tp["beta"].reshape(1, T),
         tp["b2"].reshape(1, T)], axis=0).astype(jnp.float32)          # (3, T)
    tb1 = tp["b1"].reshape(1, Ht).astype(jnp.float32)
    tw1 = tp["w1"].astype(_WEIGHT_DTYPE)                                # (T, Ht)
    tw2 = tp["w2"].astype(_WEIGHT_DTYPE)                                # (Ht, T)

    fcol = jnp.stack(
        [fp["gamma"].reshape(F), fp["beta"].reshape(F),
         fp["b2"].reshape(F)], axis=1).astype(jnp.float32)              # (F, 3)
    fb1 = fp["b1"].reshape(Hf, 1).astype(jnp.float32)
    fw1t = fp["w1"].T.astype(_WEIGHT_DTYPE)                             # (Hf, F)
    fw2t = fp["w2"].T.astype(_WEIGHT_DTYPE)                             # (F, Hf)

    param_args = (trow, tb1, tw1, tw2, fcol, fb1, fw1t, fw2t)

    # ---- explicit VMEM limit with headroom, capped to the queried capacity ----
    blk_io = TB * slab_io
    blk_f32 = TB * slab_f32
    pbytes = sum(_padded_bytes(p.shape, jnp.dtype(p.dtype).itemsize)
                 for p in param_args)
    need = 4 * blk_io + 6 * blk_f32 + 2 * pbytes + (2 << 20)
    vmem_limit = int(min(int(vmem_cap * 0.9), max(need, 16 * 2**20)))

    cmap2 = lambda i: (0, 0)
    in_specs = [
        pl.BlockSpec((TB, F, T), lambda i: (i, 0, 0)),   # x: tiled over batch
        pl.BlockSpec((3, T), cmap2),     # time LN gamma / beta / b2 (packed rows)
        pl.BlockSpec((1, Ht), cmap2),    # time b1
        pl.BlockSpec((T, Ht), cmap2),    # time W1 (bf16)
        pl.BlockSpec((Ht, T), cmap2),    # time W2 (bf16)
        pl.BlockSpec((F, 3), cmap2),     # freq LN gamma / beta / b2 (packed cols)
        pl.BlockSpec((Hf, 1), cmap2),    # freq b1 (column)
        pl.BlockSpec((Hf, F), cmap2),    # freq W1^T (bf16)
        pl.BlockSpec((F, Hf), cmap2),    # freq W2^T (bf16)
    ]
    out_specs = pl.BlockSpec((TB, F, T), lambda i: (i, 0, 0))

    kernel = _make_mixer_kernel(_use_approx_gelu())

    return pl.pallas_call(
        kernel,
        out_shape=jax.ShapeDtypeStruct((B, F, T), x.dtype),
        grid=grid,
        in_specs=in_specs,
        out_specs=out_specs,
        compiler_params=pltpu.CompilerParams(
            dimension_semantics=("parallel",),   # batch axis: megacore-shardable
            vmem_limit_bytes=vmem_limit,
        ),
        interpret=interpret,
    )(x, *param_args)


def init_mixer_params(key, time_dim, freq_dim, dtype=jnp.float32):
    """Deterministic parameter init (shapes mirror the torch module)."""
    def linear(k, fan_in, fan_out):
        kw, kb = jax.random.split(k)
        bound = 1.0 / math.sqrt(fan_in)
        w = jax.random.uniform(kw, (fan_in, fan_out), dtype, -bound, bound)
        b = jax.random.uniform(kb, (1, fan_out), dtype, -bound, bound)
        return w, b

    k1, k2, k3, k4 = jax.random.split(key, 4)
    th, fh = time_dim // 4, freq_dim // 2

    tw1, tb1 = linear(k1, time_dim, th)
    tw2, tb2 = linear(k2, th, time_dim)
    fw1, fb1 = linear(k3, freq_dim, fh)
    fw2, fb2 = linear(k4, fh, freq_dim)

    return {
        "time": {
            "gamma": jnp.ones((1, time_dim), dtype),
            "beta": jnp.zeros((1, time_dim), dtype),
            "w1": tw1, "b1": tb1, "w2": tw2, "b2": tb2,
        },
        "freq": {
            "gamma": jnp.ones((1, freq_dim), dtype),
            "beta": jnp.zeros((1, freq_dim), dtype),
            "w1": fw1, "b1": fb1, "w2": fw2, "b2": fb2,
        },
    }


def _mixer_block_reference(x, params):
    """Pure-JAX reference (f32 everywhere), mirrors MixerBlock.forward."""
    tp, fp = params["time"], params["freq"]

    def layer_norm(v, g, b):
        m = jnp.mean(v, axis=-1, keepdims=True)
        var = jnp.mean(jnp.square(v - m), axis=-1, keepdims=True)
        return (v - m) * lax.rsqrt(var + _LN_EPS) * g + b

    def ffn(v, w1, b1, w2, b2):
        h = v @ w1 + b1
        h = 0.5 * h * (1.0 + lax.erf(h * (1.0 / math.sqrt(2.0))))
        return h @ w2 + b2

    t = ffn(layer_norm(x, tp["gamma"], tp["beta"]),
            tp["w1"], tp["b1"], tp["w2"], tp["b2"])
    x = x + t
    xp = jnp.transpose(x, (0, 2, 1))
    f = ffn(layer_norm(xp, fp["gamma"], fp["beta"]),
            fp["w1"], fp["b1"], fp["w2"], fp["b2"])
    return x + jnp.transpose(f, (0, 2, 1))


# TODO(synk): nn.Dropout is not implemented (module default dropout=0.0 /
# inference mode makes it an identity).

if __name__ == "__main__":
    # Small shapes consistent with the module: time_dim=32 (//4=8), freq_dim=16 (//2=8).
    B, FREQ, TIME = 2, 16, 32
    key = jax.random.PRNGKey(0)
    kx, kx2, kp = jax.random.split(key, 3)

    x = jax.random.normal(kx, (B, FREQ, TIME), jnp.float32)
    params = init_mixer_params(kp, time_dim=TIME, freq_dim=FREQ)

    out = mixer_block(x, params)
    out = jax.block_until_ready(out)
    assert out.shape == (B, FREQ, TIME) and out.dtype == jnp.float32

    # Validate against the pure-JAX reference (tolerance covers bf16 MXU weights).
    ref = _mixer_block_reference(x, params)
    max_err = float(jnp.max(jnp.abs(out - ref)))
    assert max_err < 5e-2, f"kernel/reference mismatch: max abs err = {max_err}"

    # Ragged-grid check: B=5 forces TB=2 -> 3 grid steps with a partial last block,
    # verifying that padded samples in the final block are indeed harmless.
    x2 = jax.random.normal(kx2, (5, FREQ, TIME), jnp.float32)
    out2 = jax.block_until_ready(mixer_block(x2, params))
    ref2 = _mixer_block_reference(x2, params)
    max_err2 = float(jnp.max(jnp.abs(out2 - ref2)))
    assert max_err2 < 5e-2, f"ragged-block mismatch: max abs err = {max_err2}"

    print("KERNEL_OK")
</pallas_src>

<mosaic_0001>
module attributes {stable_mosaic.version = 11 : i64} {
  func.func @kernel(%arg0: i32, %arg1: memref<1x16x32xf32, #tpu.memory_space<vmem>>, %arg2: memref<3x32xf32, #tpu.memory_space<vmem>>, %arg3: memref<1x8xf32, #tpu.memory_space<vmem>>, %arg4: memref<32x8xbf16, #tpu.memory_space<vmem>>, %arg5: memref<8x32xbf16, #tpu.memory_space<vmem>>, %arg6: memref<16x3xf32, #tpu.memory_space<vmem>>, %arg7: memref<8x1xf32, #tpu.memory_space<vmem>>, %arg8: memref<8x16xbf16, #tpu.memory_space<vmem>>, %arg9: memref<16x8xbf16, #tpu.memory_space<vmem>>, %arg10: memref<1x16x32xf32, #tpu.memory_space<vmem>>) attributes {dimension_semantics = [#tpu.dimension_semantics<parallel>], iteration_bounds = array<i64: 2>, scalar_prefetch = 0 : i64, scratch_operands = 0 : i64, tpu.core_type = #tpu.core_type<tc>, window_params = [{transform_indices = @transform_0, window_bounds = array<i64: 1, 16, 32>}, {pipeline_mode = #tpu.pipeline_mode<synchronous>, transform_indices = @transform_1, window_bounds = array<i64: 3, 32>}, {pipeline_mode = #tpu.pipeline_mode<synchronous>, transform_indices = @transform_2, window_bounds = array<i64: 1, 8>}, {pipeline_mode = #tpu.pipeline_mode<synchronous>, transform_indices = @transform_3, window_bounds = array<i64: 32, 8>}, {pipeline_mode = #tpu.pipeline_mode<synchronous>, transform_indices = @transform_4, window_bounds = array<i64: 8, 32>}, {pipeline_mode = #tpu.pipeline_mode<synchronous>, transform_indices = @transform_5, window_bounds = array<i64: 16, 3>}, {pipeline_mode = #tpu.pipeline_mode<synchronous>, transform_indices = @transform_6, window_bounds = array<i64: 8, 1>}, {pipeline_mode = #tpu.pipeline_mode<synchronous>, transform_indices = @transform_7, window_bounds = array<i64: 8, 16>}, {pipeline_mode = #tpu.pipeline_mode<synchronous>, transform_indices = @transform_8, window_bounds = array<i64: 16, 8>}, {transform_indices = @transform_9, window_bounds = array<i64: 1, 16, 32>}]} {
    %c0 = arith.constant 0 : index
    %c0_0 = arith.constant 0 : index
    %c0_1 = arith.constant 0 : index
    %0 = vector.load %arg1[%c0, %c0_0, %c0_1] : memref<1x16x32xf32, #tpu.memory_space<vmem>>, vector<1x16x32xf32>
    %c0_2 = arith.constant 0 : index
    %c0_3 = arith.constant 0 : index
    %1 = vector.load %arg2[%c0_2, %c0_3] : memref<3x32xf32, #tpu.memory_space<vmem>>, vector<3x32xf32>
    %2 = vector.extract_strided_slice %1 {offsets = [0, 0], sizes = [1, 32], strides = [1, 1]} : vector<3x32xf32> to vector<1x32xf32>
    %3 = vector.extract_strided_slice %1 {offsets = [1, 0], sizes = [1, 32], strides = [1, 1]} : vector<3x32xf32> to vector<1x32xf32>
    %4 = vector.extract_strided_slice %1 {offsets = [2, 0], sizes = [1, 32], strides = [1, 1]} : vector<3x32xf32> to vector<1x32xf32>
    %c0_4 = arith.constant 0 : index
    %c0_5 = arith.constant 0 : index
    %5 = vector.load %arg3[%c0_4, %c0_5] : memref<1x8xf32, #tpu.memory_space<vmem>>, vector<1x8xf32>
    %c0_6 = arith.constant 0 : index
    %c0_7 = arith.constant 0 : index
    %6 = vector.load %arg4[%c0_6, %c0_7] : memref<32x8xbf16, #tpu.memory_space<vmem>>, vector<32x8xbf16>
    %c0_8 = arith.constant 0 : index
    %c0_9 = arith.constant 0 : index
    %7 = vector.load %arg5[%c0_8, %c0_9] : memref<8x32xbf16, #tpu.memory_space<vmem>>, vector<8x32xbf16>
    %c0_10 = arith.constant 0 : index
    %c0_11 = arith.constant 0 : index
    %8 = vector.load %arg6[%c0_10, %c0_11] : memref<16x3xf32, #tpu.memory_space<vmem>>, vector<16x3xf32>
    %9 = vector.extract_strided_slice %8 {offsets = [0, 0], sizes = [16, 1], strides = [1, 1]} : vector<16x3xf32> to vector<16x1xf32>
    %10 = vector.extract_strided_slice %8 {offsets = [0, 1], sizes = [16, 1], strides = [1, 1]} : vector<16x3xf32> to vector<16x1xf32>
    %11 = vector.extract_strided_slice %8 {offsets = [0, 2], sizes = [16, 1], strides = [1, 1]} : vector<16x3xf32> to vector<16x1xf32>
    %c0_12 = arith.constant 0 : index
    %c0_13 = arith.constant 0 : index
    %12 = vector.load %arg7[%c0_12, %c0_13] : memref<8x1xf32, #tpu.memory_space<vmem>>, vector<8x1xf32>
    %c0_14 = arith.constant 0 : index
    %c0_15 = arith.constant 0 : index
    %13 = vector.load %arg8[%c0_14, %c0_15] : memref<8x16xbf16, #tpu.memory_space<vmem>>, vector<8x16xbf16>
    %c0_16 = arith.constant 0 : index
    %c0_17 = arith.constant 0 : index
    %14 = vector.load %arg9[%c0_16, %c0_17] : memref<16x8xbf16, #tpu.memory_space<vmem>>, vector<16x8xbf16>
    %15 = vector.shape_cast %0 : vector<1x16x32xf32> to vector<16x32xf32>
    %cst = arith.constant dense<0.000000e+00> : vector<16xf32>
    %16 = vector.multi_reduction <add>, %15, %cst [1] : vector<16x32xf32> to vector<16xf32>
    %17 = vector.shape_cast %16 : vector<16xf32> to vector<16x1xf32>
    %cst_18 = arith.constant 3.200000e+01 : f32
    %18 = vector.broadcast %cst_18 : f32 to vector<16x1xf32>
    %19 = arith.divf %17, %18 : vector<16x1xf32>
    %20 = vector.broadcast %19 : vector<16x1xf32> to vector<16x32xf32>
    %21 = arith.subf %15, %20 : vector<16x32xf32>
    %22 = arith.mulf %21, %21 : vector<16x32xf32>
    %cst_19 = arith.constant dense<0.000000e+00> : vector<16xf32>
    %23 = vector.multi_reduction <add>, %22, %cst_19 [1] : vector<16x32xf32> to vector<16xf32>
    %24 = vector.shape_cast %23 : vector<16xf32> to vector<16x1xf32>
    %cst_20 = arith.constant 3.200000e+01 : f32
    %25 = vector.broadcast %cst_20 : f32 to vector<16x1xf32>
    %26 = arith.divf %24, %25 : vector<16x1xf32>
    %27 = vector.broadcast %19 : vector<16x1xf32> to vector<16x32xf32>
    %28 = arith.subf %15, %27 : vector<16x32xf32>
    %cst_21 = arith.constant 9.99999974E-6 : f32
    %29 = vector.broadcast %cst_21 : f32 to vector<16x1xf32>
    %30 = arith.addf %26, %29 : vector<16x1xf32>
    %31 = math.rsqrt %30 : vector<16x1xf32>
    %32 = vector.broadcast %31 : vector<16x1xf32> to vector<16x32xf32>
    %33 = arith.mulf %28, %32 : vector<16x32xf32>
    %34 = vector.broadcast %2 : vector<1x32xf32> to vector<16x32xf32>
    %35 = arith.mulf %33, %34 : vector<16x32xf32>
    %36 = vector.broadcast %3 : vector<1x32xf32> to vector<16x32xf32>
    %37 = arith.addf %35, %36 : vector<16x32xf32>
    %38 = arith.truncf %37 : vector<16x32xf32> to vector<16x32xbf16>
    %cst_22 = arith.constant dense<0.000000e+00> : vector<16x8xf32>
    %39 = tpu.matmul %38, %6, %cst_22 {dimension_numbers = #tpu.dot_dimension_numbers<[1], [0], [0], [1], [0, 0, 1, 1], [], []>} : vector<16x32xbf16>, vector<32x8xbf16>, vector<16x8xf32> -> vector<16x8xf32>
    %40 = vector.broadcast %5 : vector<1x8xf32> to vector<16x8xf32>
    %41 = arith.addf %39, %40 : vector<16x8xf32>
    %cst_23 = arith.constant 5.000000e-01 : f32
    %42 = vector.broadcast %cst_23 : f32 to vector<16x8xf32>
    %43 = arith.mulf %42, %41 : vector<16x8xf32>
    %cst_24 = arith.constant 0.707106769 : f32
    %44 = vector.broadcast %cst_24 : f32 to vector<16x8xf32>
    %45 = arith.mulf %41, %44 : vector<16x8xf32>
    %46 = math.erf %45 : vector<16x8xf32>
    %cst_25 = arith.constant 1.000000e+00 : f32
    %47 = vector.broadcast %cst_25 : f32 to vector<16x8xf32>
    %48 = arith.addf %47, %46 : vector<16x8xf32>
    %49 = arith.mulf %43, %48 : vector<16x8xf32>
    %50 = arith.truncf %49 : vector<16x8xf32> to vector<16x8xbf16>
    %cst_26 = arith.constant dense<0.000000e+00> : vector<16x32xf32>
    %51 = tpu.matmul %50, %7, %cst_26 {dimension_numbers = #tpu.dot_dimension_numbers<[1], [0], [0], [1], [0, 0, 1, 1], [], []>} : vector<16x8xbf16>, vector<8x32xbf16>, vector<16x32xf32> -> vector<16x32xf32>
    %52 = vector.broadcast %4 : vector<1x32xf32> to vector<16x32xf32>
    %53 = arith.addf %51, %52 : vector<16x32xf32>
    %54 = vector.shape_cast %53 : vector<16x32xf32> to vector<1x16x32xf32>
    %55 = arith.addf %0, %54 : vector<1x16x32xf32>
    %cst_27 = arith.constant dense<0.000000e+00> : vector<1x32xf32>
    %56 = vector.multi_reduction <add>, %55, %cst_27 [1] : vector<1x16x32xf32> to vector<1x32xf32>
    %57 = vector.shape_cast %56 : vector<1x32xf32> to vector<1x1x32xf32>
    %cst_28 = arith.constant 1.600000e+01 : f32
    %58 = vector.broadcast %cst_28 : f32 to vector<1x1x32xf32>
    %59 = arith.divf %57, %58 : vector<1x1x32xf32>
    %60 = vector.broadcast %59 : vector<1x1x32xf32> to vector<1x16x32xf32>
    %61 = arith.subf %55, %60 : vector<1x16x32xf32>
    %62 = arith.mulf %61, %61 : vector<1x16x32xf32>
    %cst_29 = arith.constant dense<0.000000e+00> : vector<1x32xf32>
    %63 = vector.multi_reduction <add>, %62, %cst_29 [1] : vector<1x16x32xf32> to vector<1x32xf32>
    %64 = vector.shape_cast %63 : vector<1x32xf32> to vector<1x1x32xf32>
    %cst_30 = arith.constant 1.600000e+01 : f32
    %65 = vector.broadcast %cst_30 : f32 to vector<1x1x32xf32>
    %66 = arith.divf %64, %65 : vector<1x1x32xf32>
    %67 = vector.broadcast %59 : vector<1x1x32xf32> to vector<1x16x32xf32>
    %68 = arith.subf %55, %67 : vector<1x16x32xf32>
    %cst_31 = arith.constant 9.99999974E-6 : f32
    %69 = vector.broadcast %cst_31 : f32 to vector<1x1x32xf32>
    %70 = arith.addf %66, %69 : vector<1x1x32xf32>
    %71 = math.rsqrt %70 : vector<1x1x32xf32>
    %72 = vector.broadcast %71 : vector<1x1x32xf32> to vector<1x16x32xf32>
    %73 = arith.mulf %68, %72 : vector<1x16x32xf32>
    %74 = vector.shape_cast %9 : vector<16x1xf32> to vector<1x16x1xf32>
    %75 = vector.broadcast %74 : vector<1x16x1xf32> to vector<1x16x32xf32>
    %76 = arith.mulf %73, %75 : vector<1x16x32xf32>
    %77 = vector.shape_cast %10 : vector<16x1xf32> to vector<1x16x1xf32>
    %78 = vector.broadcast %77 : vector<1x16x1xf32> to vector<1x16x32xf32>
    %79 = arith.addf %76, %78 : vector<1x16x32xf32>
    %80 = vector.shape_cast %13 : vector<8x16xbf16> to vector<1x8x16xbf16>
    %81 = arith.truncf %79 : vector<1x16x32xf32> to vector<1x16x32xbf16>
    "tpu.trace_start"() <{level = 10 : i32, message = "bhf,bft->bht"}> : () -> ()
    %cst_32 = arith.constant dense<0.000000e+00> : vector<1x8x32xf32>
    %82 = tpu.matmul %80, %81, %cst_32 {dimension_numbers = #tpu.dot_dimension_numbers<[2], [1], [1], [2], [0, 0, 0, 1, 1, 2], [0], [0]>} : vector<1x8x16xbf16>, vector<1x16x32xbf16>, vector<1x8x32xf32> -> vector<1x8x32xf32>
    "tpu.trace_stop"() : () -> ()
    %83 = vector.shape_cast %12 : vector<8x1xf32> to vector<1x8x1xf32>
    %84 = vector.broadcast %83 : vector<1x8x1xf32> to vector<1x8x32xf32>
    %85 = arith.addf %82, %84 : vector<1x8x32xf32>
    %cst_33 = arith.constant 5.000000e-01 : f32
    %86 = vector.broadcast %cst_33 : f32 to vector<1x8x32xf32>
    %87 = arith.mulf %86, %85 : vector<1x8x32xf32>
    %cst_34 = arith.constant 0.707106769 : f32
    %88 = vector.broadcast %cst_34 : f32 to vector<1x8x32xf32>
    %89 = arith.mulf %85, %88 : vector<1x8x32xf32>
    %90 = math.erf %89 : vector<1x8x32xf32>
    %cst_35 = arith.constant 1.000000e+00 : f32
    %91 = vector.broadcast %cst_35 : f32 to vector<1x8x32xf32>
    %92 = arith.addf %91, %90 : vector<1x8x32xf32>
    %93 = arith.mulf %87, %92 : vector<1x8x32xf32>
    %94 = vector.shape_cast %14 : vector<16x8xbf16> to vector<1x16x8xbf16>
    %95 = arith.truncf %93 : vector<1x8x32xf32> to vector<1x8x32xbf16>
    "tpu.trace_start"() <{level = 10 : i32, message = "bfh,bht->bft"}> : () -> ()
    %cst_36 = arith.constant dense<0.000000e+00> : vector<1x16x32xf32>
    %96 = tpu.matmul %94, %95, %cst_36 {dimension_numbers = #tpu.dot_dimension_numbers<[2], [1], [1], [2], [0, 0, 0, 1, 1, 2], [0], [0]>} : vector<1x16x8xbf16>, vector<1x8x32xbf16>, vector<1x16x32xf32> -> vector<1x16x32xf32>
    "tpu.trace_stop"() : () -> ()
    %97 = vector.shape_cast %11 : vector<16x1xf32> to vector<1x16x1xf32>
    %98 = vector.broadcast %97 : vector<1x16x1xf32> to vector<1x16x32xf32>
    %99 = arith.addf %96, %98 : vector<1x16x32xf32>
    %100 = arith.addf %55, %99 : vector<1x16x32xf32>
    %c0_37 = arith.constant 0 : index
    %c0_38 = arith.constant 0 : index
    %c0_39 = arith.constant 0 : index
    %101 = vector.load %arg10[%c0_37, %c0_38, %c0_39] : memref<1x16x32xf32, #tpu.memory_space<vmem>>, vector<1x16x32xf32>
    tpu.vector_store %arg10[%c0_37, %c0_38, %c0_39], %100 {strides = array<i32>} : memref<1x16x32xf32, #tpu.memory_space<vmem>>, vector<1x16x32xf32>,
    return
  }
  func.func @transform_0(%arg0: i32) -> (i32, i32, i32) {
    %c0_i32 = arith.constant 0 : i32
    %c0_i32_0 = arith.constant 0 : i32
    %c0_i32_1 = arith.constant 0 : i32
    return %arg0, %c0_i32, %c0_i32_0 : i32, i32, i32
  }
  func.func @transform_1(%arg0: i32) -> (i32, i32) {
    %c0_i32 = arith.constant 0 : i32
    %c0_i32_0 = arith.constant 0 : i32
    %c0_i32_1 = arith.constant 0 : i32
    return %c0_i32, %c0_i32_0 : i32, i32
  }
  func.func @transform_2(%arg0: i32) -> (i32, i32) {
    %c0_i32 = arith.constant 0 : i32
    %c0_i32_0 = arith.constant 0 : i32
    %c0_i32_1 = arith.constant 0 : i32
    return %c0_i32, %c0_i32_0 : i32, i32
  }
  func.func @transform_3(%arg0: i32) -> (i32, i32) {
    %c0_i32 = arith.constant 0 : i32
    %c0_i32_0 = arith.constant 0 : i32
    %c0_i32_1 = arith.constant 0 : i32
    return %c0_i32, %c0_i32_0 : i32, i32
  }
  func.func @transform_4(%arg0: i32) -> (i32, i32) {
    %c0_i32 = arith.constant 0 : i32
    %c0_i32_0 = arith.constant 0 : i32
    %c0_i32_1 = arith.constant 0 : i32
    return %c0_i32, %c0_i32_0 : i32, i32
  }
  func.func @transform_5(%arg0: i32) -> (i32, i32) {
    %c0_i32 = arith.constant 0 : i32
    %c0_i32_0 = arith.constant 0 : i32
    %c0_i32_1 = arith.constant 0 : i32
    return %c0_i32, %c0_i32_0 : i32, i32
  }
  func.func @transform_6(%arg0: i32) -> (i32, i32) {
    %c0_i32 = arith.constant 0 : i32
    %c0_i32_0 = arith.constant 0 : i32
    %c0_i32_1 = arith.constant 0 : i32
    return %c0_i32, %c0_i32_0 : i32, i32
  }
  func.func @transform_7(%arg0: i32) -> (i32, i32) {
    %c0_i32 = arith.constant 0 : i32
    %c0_i32_0 = arith.constant 0 : i32
    %c0_i32_1 = arith.constant 0 : i32
    return %c0_i32, %c0_i32_0 : i32, i32
  }
  func.func @transform_8(%arg0: i32) -> (i32, i32) {
    %c0_i32 = arith.constant 0 : i32
    %c0_i32_0 = arith.constant 0 : i32
    %c0_i32_1 = arith.constant 0 : i32
    return %c0_i32, %c0_i32_0 : i32, i32
  }
  func.func @transform_9(%arg0: i32) -> (i32, i32, i32) {
    %c0_i32 = arith.constant 0 : i32
    %c0_i32_0 = arith.constant 0 : i32
    %c0_i32_1 = arith.constant 0 : i32
    return %arg0, %c0_i32, %c0_i32_0 : i32, i32, i32
  }
}

</mosaic_0001>

<llo_original>
// kernel: tpu_custom_call.1
$region0: #{tpu_custom_call.1}
  #allocation0 [shape = 'u32[]', space=smem, size = 0x4, offset = 0x4, fixed_abs, tag = 'smem constant byte address 0x4 - core index']
  #allocation1 [shape = 'u32[72,128]{1,0:T(1,128)}', space=vmem, size = 0x9000, scoped, tag = 'internal scratch']
  %s0 = inlined_call_operand.vmem [shape: f32[2,16,32], index: 0, kind: input, shape index: {}]
  %s1 = inlined_call_operand.vmem [shape: f32[3,32], index: 1, kind: input, shape index: {}]
  %s2 = inlined_call_operand.vmem [shape: f32[1,8], index: 2, kind: input, shape index: {}]
  %s3 = inlined_call_operand.vmem [shape: bf16[32,8], index: 3, kind: input, shape index: {}]
  %s4 = inlined_call_operand.vmem [shape: bf16[8,32], index: 4, kind: input, shape index: {}]
  %s5 = inlined_call_operand.vmem [shape: f32[16,3], index: 5, kind: input, shape index: {}]
  %s6 = inlined_call_operand.vmem [shape: f32[8,1], index: 6, kind: input, shape index: {}]
  %s7 = inlined_call_operand.vmem [shape: bf16[8,16], index: 7, kind: input, shape index: {}]
  %s8 = inlined_call_operand.vmem [shape: bf16[16,8], index: 8, kind: input, shape index: {}]
  %s9 = inlined_call_operand.hbm [shape: f32[2,16,32], index: 9, kind: output, shape index: {}]
  %s10 = sld [smem:[#allocation0]]
  $region69: #{tpu_custom_call.1} parent=0
    _
  %s12 = ssub.s32 1, %s10
  %s13 = scalar_select 0, %s12, %s10
  $region1: #{tpu_custom_call.1} parent=0
    #allocation2 [shape = 'u8[16384]{0}', space=vmem, size = 0x4000, scoped, tag = 'output window, operand 0']
    #allocation3 [shape = 's32[2]{0}', space=sflag, size = 0x8, scoped, tag = 'scoped memory for tpu_custom_call.1']
    %14 = vsyncpa [#allocation3], 0
    %s15 = scalar_lea.sflag [#allocation3], 1
    %16 = vsyncpa %s15, 0
    loop: start=0, step=1, limit=4
    $region2: #{tpu_custom_call.1} parent=1 // loop_pre_header
      _
    $region3: #{tpu_custom_call.1} parent=1 // loop_header
      %s18 = sphi 0, %s22
      %p19 = scmp.ge.s32.totalorder %s18, 4
      %s28 = sphi 0, %s30
      %s31 = sphi 0, %s28
      %s32 = sphi 0, %s31
      %s48 = sphi 0, %s32
      %s52 = sphi 0, %s52
      %s54 = sphi 0, %s52
      %s55 = sphi 0, %s54
      %s69 = sphi 0, %s55
      %s73 = sphi 0, %s73
      %s75 = sphi 0, %s73
      %s76 = sphi 0, %s75
      %s90 = sphi 0, %s76
      %s94 = sphi 0, %s94
      %s96 = sphi 0, %s94
      %s97 = sphi 0, %s96
      %s111 = sphi 0, %s97
      %s115 = sphi 0, %s115
      %s117 = sphi 0, %s115
      %s118 = sphi 0, %s117
      %s132 = sphi 0, %s118
      %s136 = sphi 0, %s136
      %s138 = sphi 0, %s136
      %s139 = sphi 0, %s138
      %s153 = sphi 0, %s139
      %s157 = sphi 0, %s157
      %s159 = sphi 0, %s157
      %s160 = sphi 0, %s159
      %s174 = sphi 0, %s160
      %s178 = sphi 0, %s178
      %s180 = sphi 0, %s178
      %s181 = sphi 0, %s180
      %s195 = sphi 0, %s181
      %s199 = sphi 0, %s199
      %s201 = sphi 0, %s199
      %s202 = sphi 0, %s201
      %s216 = sphi 0, %s202
      %s222 = sphi 0, %s224
      %s225 = sphi 0, %s222
      %s226 = sphi 0, %s225
      %s242 = sphi 0, %s226
    $region4: #{tpu_custom_call.1} parent=1 // loop_header_branch
      %21 = sbr.rel (%p19) target = $region8
    $region5: #{tpu_custom_call.1} parent=1 // loop_body
      %s23 = ssub.s32 %s18, 1
      %s24 = ssub.s32 %s18, 2
      %s25 = sadd.s32 %s18, 1
      %s26 = ssub.s32 %s18, %s25
      %p27 = scmp.eq.s32.totalorder %s26, 0
      %s29 = sadd.s32 %s28, 1
      %s30 = scalar_select %p27, %s28, %s29
      %p33 = pneg %p27
      %p34 = scmp.eq.s32.totalorder %s18, 1
      %p35 = por %p33, %p34
      %p36 = scmp.ne.s32.totalorder %s28, %s31
      %p37 = scmp.eq.s32.totalorder %s18, 0
      %p38 = por %p36, %p37
      %p39 = scmp.ne.s32.totalorder %s28, %s31
      %p40 = scmp.eq.s32.totalorder %s23, 1
      %p41 = por %p39, %p40
      %p42 = scmp.ne.s32.totalorder %s31, %s32
      %p43 = scmp.eq.s32.totalorder %s23, 0
      %p44 = por %p42, %p43
      %p45 = scmp.ne.s32.totalorder %s31, %s32
      %p46 = scmp.eq.s32.totalorder %s24, 1
      %p47 = por %p45, %p46
      %p49 = scmp.ne.s32.totalorder %s32, %s48
      %p50 = scmp.eq.s32.totalorder %s24, 0
      %p51 = por %p49, %p50
      %s53 = sadd.s32 %s52, 1
      %p56 = scmp.eq.s32.totalorder %s18, 1
      %p57 = scmp.ne.s32.totalorder %s52, %s54
      %p58 = scmp.eq.s32.totalorder %s18, 0
      %p59 = por %p57, %p58
      %p60 = scmp.ne.s32.totalorder %s52, %s54
      %p61 = scmp.eq.s32.totalorder %s23, 1
      %p62 = por %p60, %p61
      %p63 = scmp.ne.s32.totalorder %s54, %s55
      %p64 = scmp.eq.s32.totalorder %s23, 0
      %p65 = por %p63, %p64
      %p66 = scmp.ne.s32.totalorder %s54, %s55
      %p67 = scmp.eq.s32.totalorder %s24, 1
      %p68 = por %p66, %p67
      %p70 = scmp.ne.s32.totalorder %s55, %s69
      %p71 = scmp.eq.s32.totalorder %s24, 0
      %p72 = por %p70, %p71
      %s74 = sadd.s32 %s73, 1
      %p77 = scmp.eq.s32.totalorder %s18, 1
      %p78 = scmp.ne.s32.totalorder %s73, %s75
      %p79 = scmp.eq.s32.totalorder %s18, 0
      %p80 = por %p78, %p79
      %p81 = scmp.ne.s32.totalorder %s73, %s75
      %p82 = scmp.eq.s32.totalorder %s23, 1
      %p83 = por %p81, %p82
      %p84 = scmp.ne.s32.totalorder %s75, %s76
      %p85 = scmp.eq.s32.totalorder %s23, 0
      %p86 = por %p84, %p85
      %p87 = scmp.ne.s32.totalorder %s75, %s76
      %p88 = scmp.eq.s32.totalorder %s24, 1
      %p89 = por %p87, %p88
      %p91 = scmp.ne.s32.totalorder %s76, %s90
      %p92 = scmp.eq.s32.totalorder %s24, 0
      %p93 = por %p91, %p92
      %s95 = sadd.s32 %s94, 1
      %p98 = scmp.eq.s32.totalorder %s18, 1
      %p99 = scmp.ne.s32.totalorder %s94, %s96
      %p100 = scmp.eq.s32.totalorder %s18, 0
      %p101 = por %p99, %p100
      %p102 = scmp.ne.s32.totalorder %s94, %s96
      %p103 = scmp.eq.s32.totalorder %s23, 1
      %p104 = por %p102, %p103
      %p105 = scmp.ne.s32.totalorder %s96, %s97
      %p106 = scmp.eq.s32.totalorder %s23, 0
      %p107 = por %p105, %p106
      %p108 = scmp.ne.s32.totalorder %s96, %s97
      %p109 = scmp.eq.s32.totalorder %s24, 1
      %p110 = por %p108, %p109
      %p112 = scmp.ne.s32.totalorder %s97, %s111
      %p113 = scmp.eq.s32.totalorder %s24, 0
      %p114 = por %p112, %p113
      %s116 = sadd.s32 %s115, 1
      %p119 = scmp.eq.s32.totalorder %s18, 1
      %p120 = scmp.ne.s32.totalorder %s115, %s117
      %p121 = scmp.eq.s32.totalorder %s18, 0
      %p122 = por %p120, %p121
      %p123 = scmp.ne.s32.totalorder %s115, %s117
      %p124 = scmp.eq.s32.totalorder %s23, 1
      %p125 = por %p123, %p124
      %p126 = scmp.ne.s32.totalorder %s117, %s118
      %p127 = scmp.eq.s32.totalorder %s23, 0
      %p128 = por %p126, %p127
      %p129 = scmp.ne.s32.totalorder %s117, %s118
      %p130 = scmp.eq.s32.totalorder %s24, 1
      %p131 = por %p129, %p130
      %p133 = scmp.ne.s32.totalorder %s118, %s132
      %p134 = scmp.eq.s32.totalorder %s24, 0
      %p135 = por %p133, %p134
      %s137 = sadd.s32 %s136, 1
      %p140 = scmp.eq.s32.totalorder %s18, 1
      %p141 = scmp.ne.s32.totalorder %s136, %s138
      %p142 = scmp.eq.s32.totalorder %s18, 0
      %p143 = por %p141, %p142
      %p144 = scmp.ne.s32.totalorder %s136, %s138
      %p145 = scmp.eq.s32.totalorder %s23, 1
      %p146 = por %p144, %p145
      %p147 = scmp.ne.s32.totalorder %s138, %s139
      %p148 = scmp.eq.s32.totalorder %s23, 0
      %p149 = por %p147, %p148
      %p150 = scmp.ne.s32.totalorder %s138, %s139
      %p151 = scmp.eq.s32.totalorder %s24, 1
      %p152 = por %p150, %p151
      %p154 = scmp.ne.s32.totalorder %s139, %s153
      %p155 = scmp.eq.s32.totalorder %s24, 0
      %p156 = por %p154, %p155
      %s158 = sadd.s32 %s157, 1
      %p161 = scmp.eq.s32.totalorder %s18, 1
      %p162 = scmp.ne.s32.totalorder %s157, %s159
      %p163 = scmp.eq.s32.totalorder %s18, 0
      %p164 = por %p162, %p163
      %p165 = scmp.ne.s32.totalorder %s157, %s159
      %p166 = scmp.eq.s32.totalorder %s23, 1
      %p167 = por %p165, %p166
      %p168 = scmp.ne.s32.totalorder %s159, %s160
      %p169 = scmp.eq.s32.totalorder %s23, 0
      %p170 = por %p168, %p169
      %p171 = scmp.ne.s32.totalorder %s159, %s160
      %p172 = scmp.eq.s32.totalorder %s24, 1
      %p173 = por %p171, %p172
      %p175 = scmp.ne.s32.totalorder %s160, %s174
      %p176 = scmp.eq.s32.totalorder %s24, 0
      %p177 = por %p175, %p176
      %s179 = sadd.s32 %s178, 1
      %p182 = scmp.eq.s32.totalorder %s18, 1
      %p183 = scmp.ne.s32.totalorder %s178, %s180
      %p184 = scmp.eq.s32.totalorder %s18, 0
      %p185 = por %p183, %p184
      %p186 = scmp.ne.s32.totalorder %s178, %s180
      %p187 = scmp.eq.s32.totalorder %s23, 1
      %p188 = por %p186, %p187
      %p189 = scmp.ne.s32.totalorder %s180, %s181
      %p190 = scmp.eq.s32.totalorder %s23, 0
      %p191 = por %p189, %p190
      %p192 = scmp.ne.s32.totalorder %s180, %s181
      %p193 = scmp.eq.s32.totalorder %s24, 1
      %p194 = por %p192, %p193
      %p196 = scmp.ne.s32.totalorder %s181, %s195
      %p197 = scmp.eq.s32.totalorder %s24, 0
      %p198 = por %p196, %p197
      %s200 = sadd.s32 %s199, 1
      %p203 = scmp.eq.s32.totalorder %s18, 1
      %p204 = scmp.ne.s32.totalorder %s199, %s201
      %p205 = scmp.eq.s32.totalorder %s18, 0
      %p206 = por %p204, %p205
      %p207 = scmp.ne.s32.totalorder %s199, %s201
      %p208 = scmp.eq.s32.totalorder %s23, 1
      %p209 = por %p207, %p208
      %p210 = scmp.ne.s32.totalorder %s201, %s202
      %p211 = scmp.eq.s32.totalorder %s23, 0
      %p212 = por %p210, %p211
      %p213 = scmp.ne.s32.totalorder %s201, %s202
      %p214 = scmp.eq.s32.totalorder %s24, 1
      %p215 = por %p213, %p214
      %p217 = scmp.ne.s32.totalorder %s202, %s216
      %p218 = scmp.eq.s32.totalorder %s24, 0
      %p219 = por %p217, %p218
      %s220 = ssub.s32 %s18, %s25
      %p221 = scmp.eq.s32.totalorder %s220, 0
      %s223 = sadd.s32 %s222, 1
      %s224 = scalar_select %p221, %s222, %s223
      %p227 = pneg %p221
      %p228 = scmp.eq.s32.totalorder %s18, 1
      %p229 = por %p227, %p228
      %p230 = scmp.ne.s32.totalorder %s222, %s225
      %p231 = scmp.eq.s32.totalorder %s18, 0
      %p232 = por %p230, %p231
      %p233 = scmp.ne.s32.totalorder %s222, %s225
      %p234 = scmp.eq.s32.totalorder %s23, 1
      %p235 = por %p233, %p234
      %p236 = scmp.ne.s32.totalorder %s225, %s226
      %p237 = scmp.eq.s32.totalorder %s23, 0
      %p238 = por %p236, %p237
      %p239 = scmp.ne.s32.totalorder %s225, %s226
      %p240 = scmp.eq.s32.totalorder %s24, 1
      %p241 = por %p239, %p240
      %p243 = scmp.ne.s32.totalorder %s226, %s242
      %p244 = scmp.eq.s32.totalorder %s24, 0
      %p245 = por %p243, %p244
      %p246 = scmp.le.s32.totalorder 1, %s18
      %p247 = scmp.lt.s32.totalorder %s18, 3
      %p248 = pnand %p246, %p247
      %p249 = pneg %p248
      // Predicated region
      $region9: #{tpu_custom_call.1} parent=5 // pred_check
        _
      $region10: #{tpu_custom_call.1} parent=5 // pred_check_branch
        %251 = sbr.rel (%p248) target = $region12
      $region11: #{tpu_custom_call.1} parent=5 // pred_region
        %s252 = ssub.s32 %s18, 1
        // Predicated region
        $region13: #{tpu_custom_call.1} parent=11 // pred_check
          %p253 = pneg %p65
        $region14: #{tpu_custom_call.1} parent=11 // pred_check_branch
          %255 = sbr.rel (%p253) target = $region16
        $region15: #{tpu_custom_call.1} parent=11 // pred_region
          _
        $region16: #{tpu_custom_call.1} parent=11 // pred_fallthru
          _
        // Predicated region
        $region17: #{tpu_custom_call.1} parent=11 // pred_check
          %p256 = pneg %p86
        $region18: #{tpu_custom_call.1} parent=11 // pred_check_branch
          %258 = sbr.rel (%p256) target = $region20
        $region19: #{tpu_custom_call.1} parent=11 // pred_region
          _
        $region20: #{tpu_custom_call.1} parent=11 // pred_fallthru
          _
        // Predicated region
        $region21: #{tpu_custom_call.1} parent=11 // pred_check
          %p259 = pneg %p107
        $region22: #{tpu_custom_call.1} parent=11 // pred_check_branch
          %261 = sbr.rel (%p259) target = $region24
        $region23: #{tpu_custom_call.1} parent=11 // pred_region
          _
        $region24: #{tpu_custom_call.1} parent=11 // pred_fallthru
          _
        // Predicated region
        $region25: #{tpu_custom_call.1} parent=11 // pred_check
          %p262 = pneg %p128
        $region26: #{tpu_custom_call.1} parent=11 // pred_check_branch
          %264 = sbr.rel (%p262) target = $region28
        $region27: #{tpu_custom_call.1} parent=11 // pred_region
          _
        $region28: #{tpu_custom_call.1} parent=11 // pred_fallthru
          _
        // Predicated region
        $region29: #{tpu_custom_call.1} parent=11 // pred_check
          %p265 = pneg %p149
        $region30: #{tpu_custom_call.1} parent=11 // pred_check_branch
          %267 = sbr.rel (%p265) target = $region32
        $region31: #{tpu_custom_call.1} parent=11 // pred_region
          _
        $region32: #{tpu_custom_call.1} parent=11 // pred_fallthru
          _
        // Predicated region
        $region33: #{tpu_custom_call.1} parent=11 // pred_check
          %p268 = pneg %p170
        $region34: #{tpu_custom_call.1} parent=11 // pred_check_branch
          %270 = sbr.rel (%p268) target = $region36
        $region35: #{tpu_custom_call.1} parent=11 // pred_region
          _
        $region36: #{tpu_custom_call.1} parent=11 // pred_fallthru
          _
        // Predicated region
        $region37: #{tpu_custom_call.1} parent=11 // pred_check
          %p271 = pneg %p191
        $region38: #{tpu_custom_call.1} parent=11 // pred_check_branch
          %273 = sbr.rel (%p271) target = $region40
        $region39: #{tpu_custom_call.1} parent=11 // pred_region
          _
        $region40: #{tpu_custom_call.1} parent=11 // pred_fallthru
          _
        // Predicated region
        $region41: #{tpu_custom_call.1} parent=11 // pred_check
          %p274 = pneg %p212
        $region42: #{tpu_custom_call.1} parent=11 // pred_check_branch
          %276 = sbr.rel (%p274) target = $region44
        $region43: #{tpu_custom_call.1} parent=11 // pred_region
          _
        $region44: #{tpu_custom_call.1} parent=11 // pred_fallthru
          _
      $region12: #{tpu_custom_call.1} parent=5 // pred_fallthru
        _
      %p277 = scmp.lt.s32.totalorder %s18, 2
      // Predicated region
      $region45: #{tpu_custom_call.1} parent=5 // pred_check
        %p278 = pneg %p277
      $region46: #{tpu_custom_call.1} parent=5 // pred_check_branch
        %280 = sbr.rel (%p278) target = $region48
      $region47: #{tpu_custom_call.1} parent=5 // pred_region
        // Predicated region
        $region49: #{tpu_custom_call.1} parent=47 // pred_check
          %p281 = pneg %p38
        $region50: #{tpu_custom_call.1} parent=47 // pred_check_branch
          %283 = sbr.rel (%p281) target = $region52
        $region51: #{tpu_custom_call.1} parent=47 // pred_region
          %p284 = scmp.lt.s32.totalorder %s18, 1
          %s285 = scalar_select %p284, %s18, 1
          %s286 = smul.addr %s285, 2
          %s287 = smul.addr %s286, 8
          %s288 = scalar_lea.vmem %s0, %s287
        $region52: #{tpu_custom_call.1} parent=47 // pred_fallthru
          _
      $region48: #{tpu_custom_call.1} parent=5 // pred_fallthru
        _
      %p289 = scmp.le.s32.totalorder 1, %s18
      %p290 = scmp.lt.s32.totalorder %s18, 3
      %p291 = pnand %p289, %p290
      %p292 = pneg %p291
      // Predicated region
      $region53: #{tpu_custom_call.1} parent=5 // pred_check
        _
      $region54: #{tpu_custom_call.1} parent=5 // pred_check_branch
        %294 = sbr.rel (%p291) target = $region56
      $region55: #{tpu_custom_call.1} parent=5 // pred_region
        %s295 = ssub.s32 %s18, 1
        %p296 = scmp.lt.s32.totalorder %s23, 1
        %s297 = scalar_select %p296, %s23, 1
        %s298 = smul.addr %s297, 2
        %s299 = smul.addr %s298, 8
        %s300 = scalar_lea.vmem %s0, %s299
        %p301 = pneg %p44
        %p302 = pneg %p41
        %p303 = pneg %p65
        %p304 = pneg %p62
        %p305 = pneg %p86
        %p306 = pneg %p83
        %p307 = pneg %p107
        %p308 = pneg %p104
        %p309 = pneg %p128
        %p310 = pneg %p125
        %p311 = pneg %p149
        %p312 = pneg %p146
        %p313 = pneg %p170
        %p314 = pneg %p167
        %p315 = pneg %p191
        %p316 = pneg %p188
        %p317 = pneg %p212
        %p318 = pneg %p209
        %p319 = pneg %p238
        %p320 = pneg %p235
        %s321 = sand.u32 %s225, 1
        %s322 = scalar_lea.sflag [#allocation3], %s321
        %s323 = sand.u32 %s225, 1
        %s324 = smul.addr %s323, 16
        %s325 = scalar_lea.vmem [#allocation2], %s324
        %p326 = scmp.lt.s32.totalorder %s23, 1
        %s327 = scalar_select %p326, %s23, 1
        %s328 = smul.addr %s327, 2
        %s329 = smul.addr %s328, 8
        %s330 = scalar_lea.vmem %s0, %s329
        %v332 = vld [vmem:[%s330] sm:$0xff]
        %v333 = vld [vmem:[%s330 + $0x8] sm:$0xff]
        %v334 = vld [vmem:[%s1] sm:$0x7]
        %v335 = vld [vmem:[%s2] sm:$0x1]
        %v336 = vld [vmem:[%s3] sm:$0xf]
        %v337 = vld [vmem:[%s3 + $0x4] sm:$0xf]
        %v338 = vld [vmem:[%s3 + $0x8] sm:$0xf]
        %v339 = vld [vmem:[%s3 + $0xc] sm:$0xf]
        %v340 = vld [vmem:[%s4] sm:$0xf]
        %v341 = vld [vmem:[%s5] sm:$0xff]
        %v342 = vld [vmem:[%s5 + $0x8] sm:$0xff]
        %v343 = vld [vmem:[%s6] sm:$0xff]
        %v344 = vld [vmem:[%s7] sm:$0xf]
        %v345 = vld [vmem:[%s8] sm:$0xf]
        %v346 = vld [vmem:[%s8 + $0x4] sm:$0xf]
        %vm347 = vcmask 261120
        %v348 = vsel %vm347, %v332, 0.0
        %349 = vadd.xlane.f32.xlu0 %v348
        %v350 = vpop.xlane.xlu0 %349
        %v351 = vsel %vm347, %v333, 0.0
        %352 = vadd.xlane.f32.xlu0 %v351
        %v353 = vpop.xlane.xlu0 %352
        %v354 = vrcp.pop 32.0
        %v355 = vmul.f32 32.0, %v354
        %v356 = vsub.f32 1.0, %v355
        %v357 = vmul.f32 %v354, %v356
        %v358 = vadd.f32 %v354, %v357
        %vm359 = vweird.f32 %v354
        %v360 = vsel %vm359, %v354, %v358
        %v361 = vmul.f32 %v350, %v360
        %v362 = vmul.f32 %v353, %v360
        %v363 = vsub.f32 %v332, %v361
        %v364 = vsub.f32 %v333, %v362
        %v365 = vmul.f32 %v363, %v363
        %v366 = vmul.f32 %v364, %v364
        %v367 = vsel %vm347, %v365, 0.0
        %368 = vadd.xlane.f32.xlu0 %v367
        %v369 = vpop.xlane.xlu0 %368
        %v370 = vsel %vm347, %v366, 0.0
        %371 = vadd.xlane.f32.xlu0 %v370
        %v372 = vpop.xlane.xlu0 %371
        %v373 = vmul.f32 %v369, %v360
        %v374 = vmul.f32 %v372, %v360
        %v375 = vadd.f32 %v373, 1e-05
        %v376 = vadd.f32 %v374, 1e-05
        %v377 = vrsqrt.pop %v375
        %v378 = vmul.f32 %v377, %v375
        %v379 = vmul.f32 %v378, %v377
        %v380 = vmul.f32 0.5, %v379
        %v381 = vsub.f32 1.5, %v380
        %v382 = vmul.f32 %v377, %v381
        %vm383 = vweird.f32 %v375
        %vm384 = vweird.f32 %v377
        %vm385 = vmor %vm383, %vm384
        %v386 = vsel %vm385, %v377, %v382
        %v387 = vrsqrt.pop %v376
        %v388 = vmul.f32 %v387, %v376
        %v389 = vmul.f32 %v388, %v387
        %v390 = vmul.f32 0.5, %v389
        %v391 = vsub.f32 1.5, %v390
        %v392 = vmul.f32 %v387, %v391
        %vm393 = vweird.f32 %v376
        %vm394 = vweird.f32 %v387
        %vm395 = vmor %vm393, %vm394
        %v396 = vsel %vm395, %v387, %v392
        %v397 = vmul.f32 %v363, %v386
        %v398 = vmul.f32 %v364, %v396
        %v399 = vperm.slane %v334, 0
        %v400 = vmul.f32 %v397, %v399
        %v401 = vmul.f32 %v398, %v399
        %v402 = vperm.slane %v334, 1
        %v403 = vadd.f32 %v400, %v402
        %v404 = vadd.f32 %v401, %v402
        %v405 = vpack.c.bf16 %v404, %v403
        %v407 = vperm.slane %v335, 0
        %v413 = vunpack.c.l.b16 %v336
        %v414 = vunpack.c.l.b16 %v337
        %v415 = vunpack.c.l.b16 %v338
        %v416 = vunpack.c.l.b16 %v339
        %v417 = vpack.c.b16 %v414, %v413
        %v418 = vpack.c.b16 %v416, %v415
        %v422 = vsel %vm347, %v405, 0
        %424 = vmatpush.bf16.msra.mxu0 0
        %425 = vmatpush.bf16.msra.mxu0 0
        %426 = vmatpush.bf16.msra.mxu0 0
        %427 = vmatpush.bf16.msra.mxu0 0
        %428 = vmatpush.bf16.msra.mxu0 0
        %429 = vmatpush.bf16.msra.mxu0 0
        %430 = vmatpush.bf16.msra.mxu0 %v418
        %431 = vmatpush.bf16.msra.mxu0 %v417
        %432 = vmatmul.bf16.gmra.mxu0 %v422
        %v433 = vpop.f32.mrf.mxu0
        %v434 = vadd.f32 %v407, %v433
        %v435 = vpop.f32.mrf.mxu0
        %v436 = vadd.f32 %v407, %v435
        %437 = vdwg.mxu0
        %v438 = vmul.f32 %v434, 0.5
        %v439 = vmul.f32 %v436, 0.5
        %v440 = vmul.f32 %v434, 0.70710677
        %v441 = vmul.f32 %v436, 0.70710677
        %v442 = vmul.f32 %v440, %v440
        %v443 = vmin.f32 16.0, %v442
        %v444 = vmul.f32 %v443, 2.1237322e-06
        %v445 = vadd.f32 %v444, 0.00028619796
        %v446 = vmul.f32 %v443, %v445
        %v447 = vadd.f32 %v446, 0.0036580483
        %v448 = vmul.f32 %v443, %v447
        %v449 = vadd.f32 %v448, 0.05243302
        %v450 = vmul.f32 %v443, %v449
        %v451 = vadd.f32 %v450, 0.18741608
        %v452 = vmul.f32 %v443, %v451
        %v453 = vadd.f32 %v452, 1.1283791
        %v454 = vmul.f32 %v440, %v453
        %v455 = vmul.f32 %v443, 3.8918573e-05
        %v456 = vadd.f32 %v455, 0.001143296
        %v457 = vmul.f32 %v443, %v456
        %v458 = vadd.f32 %v457, 0.014752088
        %v459 = vmul.f32 %v443, %v458
        %v460 = vadd.f32 %v459, 0.112945676
        %v461 = vmul.f32 %v443, %v460
        %v462 = vadd.f32 %v461, 0.4994258
        %v463 = vmul.f32 %v443, %v462
        %v464 = vadd.f32 %v463, 1.0
        %v465 = vrcp.pop %v464
        %v466 = vmul.f32 %v464, %v465
        %v467 = vsub.f32 1.0, %v466
        %v468 = vmul.f32 %v465, %v467
        %v469 = vadd.f32 %v465, %v468
        %vm470 = vweird.f32 %v464
        %vm471 = vweird.f32 %v465
        %vm472 = vmor %vm470, %vm471
        %v473 = vsel %vm472, %v465, %v469
        %v474 = vand.u32 2147483647, %v464
        %vm475 = vcmp.eq.f32.partialorder %v474, 8.507059e+37
        %v476 = vand.u32 %v464, 2147483648
        %v477 = vor.u32 1.1754944e-38, %v476
        %v478 = vsel %vm475, %v477, %v473
        %v479 = vmul.f32 %v454, %v478
        %v480 = vmin.f32 %v479, 1.0
        %v481 = vmax.f32 %v480, -1.0
        %v482 = vmul.f32 %v441, %v441
        %v483 = vmin.f32 16.0, %v482
        %v484 = vmul.f32 %v483, 2.1237322e-06
        %v485 = vadd.f32 %v484, 0.00028619796
        %v486 = vmul.f32 %v483, %v485
        %v487 = vadd.f32 %v486, 0.0036580483
        %v488 = vmul.f32 %v483, %v487
        %v489 = vadd.f32 %v488, 0.05243302
        %v490 = vmul.f32 %v483, %v489
        %v491 = vadd.f32 %v490, 0.18741608
        %v492 = vmul.f32 %v483, %v491
        %v493 = vadd.f32 %v492, 1.1283791
        %v494 = vmul.f32 %v441, %v493
        %v495 = vmul.f32 %v483, 3.8918573e-05
        %v496 = vadd.f32 %v495, 0.001143296
        %v497 = vmul.f32 %v483, %v496
        %v498 = vadd.f32 %v497, 0.014752088
        %v499 = vmul.f32 %v483, %v498
        %v500 = vadd.f32 %v499, 0.112945676
        %v501 = vmul.f32 %v483, %v500
        %v502 = vadd.f32 %v501, 0.4994258
        %v503 = vmul.f32 %v483, %v502
        %v504 = vadd.f32 %v503, 1.0
        %v505 = vrcp.pop %v504
        %v506 = vmul.f32 %v504, %v505
        %v507 = vsub.f32 1.0, %v506
        %v508 = vmul.f32 %v505, %v507
        %v509 = vadd.f32 %v505, %v508
        %vm510 = vweird.f32 %v504
        %vm511 = vweird.f32 %v505
        %vm512 = vmor %vm510, %vm511
        %v513 = vsel %vm512, %v505, %v509
        %v514 = vand.u32 2147483647, %v504
        %vm515 = vcmp.eq.f32.partialorder %v514, 8.507059e+37
        %v516 = vand.u32 %v504, 2147483648
        %v517 = vor.u32 1.1754944e-38, %v516
        %v518 = vsel %vm515, %v517, %v513
        %v519 = vmul.f32 %v494, %v518
        %v520 = vmin.f32 %v519, 1.0
        %v521 = vmax.f32 %v520, -1.0
        %v522 = vadd.f32 %v481, 1.0
        %v523 = vadd.f32 %v521, 1.0
        %v524 = vmul.f32 %v438, %v522
        %v525 = vmul.f32 %v439, %v523
        %v526 = vpack.c.bf16 %v525, %v524
        %v527 = vperm.slane %v334, 2
        %vm528 = vcmask 64512
        %v530 = vsel %vm528, %v526, 0
        %vm532 = vcmask 1043456
        %v534 = vsel %vm532, %v340, 0
        %536 = vmatpush.bf16.msra.mxu0 0
        %537 = vmatpush.bf16.msra.mxu0 0
        %538 = vmatpush.bf16.msra.mxu0 0
        %539 = vmatpush.bf16.msra.mxu0 0
        %540 = vmatpush.bf16.msra.mxu0 0
        %541 = vmatpush.bf16.msra.mxu0 0
        %542 = vmatpush.bf16.msra.mxu0 0
        %543 = vmatpush.bf16.msra.mxu0 %v534
        %544 = vmatmul.bf16.gmra.mxu0 %v530
        %v545 = vpop.f32.mrf.mxu0
        %v546 = vadd.f32 %v527, %v545
        %v547 = vpop.f32.mrf.mxu0
        %v548 = vadd.f32 %v527, %v547
        %549 = vdwg.mxu0
        %v550 = vadd.f32 %v332, %v546
        %v551 = vadd.f32 %v333, %v548
        %v552 = vsel %vm347, %v550, 0.0
        %v553 = vsel %vm347, %v551, 0.0
        %v554 = vadd.f32 %v552, %v553
        %v555 = vrot.slane %v554, 4
        %v556 = vadd.f32 %v554, %v555
        %v557 = vrot.slane %v556, 2
        %v558 = vadd.f32 %v556, %v557
        %v559 = vrot.slane %v558, 1
        %v560 = vadd.f32 %v558, %v559
        %v561 = vrcp.pop 16.0
        %v562 = vmul.f32 16.0, %v561
        %v563 = vsub.f32 1.0, %v562
        %v564 = vmul.f32 %v561, %v563
        %v565 = vadd.f32 %v561, %v564
        %vm566 = vweird.f32 %v561
        %v567 = vsel %vm566, %v561, %v565
        %v568 = vmul.f32 %v560, %v567
        %v569 = vsub.f32 %v550, %v568
        %v570 = vsub.f32 %v551, %v568
        %v571 = vmul.f32 %v569, %v569
        %v572 = vmul.f32 %v570, %v570
        %v573 = vsel %vm347, %v571, 0.0
        %v574 = vsel %vm347, %v572, 0.0
        %v575 = vadd.f32 %v573, %v574
        %v576 = vrot.slane %v575, 4
        %v577 = vadd.f32 %v575, %v576
        %v578 = vrot.slane %v577, 2
        %v579 = vadd.f32 %v577, %v578
        %v580 = vrot.slane %v579, 1
        %v581 = vadd.f32 %v579, %v580
        %v582 = vmul.f32 %v581, %v567
        %v583 = vadd.f32 %v582, 1e-05
        %v584 = vrsqrt.pop %v583
        %v585 = vmul.f32 %v584, %v583
        %v586 = vmul.f32 %v585, %v584
        %v587 = vmul.f32 0.5, %v586
        %v588 = vsub.f32 1.5, %v587
        %v589 = vmul.f32 %v584, %v588
        %vm590 = vweird.f32 %v583
        %vm591 = vweird.f32 %v584
        %vm592 = vmor %vm590, %vm591
        %v593 = vsel %vm592, %v584, %v589
        %v594 = vmul.f32 %v569, %v593
        %v595 = vmul.f32 %v570, %v593
        %597 = vset.pattern.permute.xlu0 0
        %598 = vperm.xlu0 %597, %v341
        %v599 = vpop.permute.xlu0 %598
        %602 = vset.pattern.permute.xlu0 0
        %603 = vperm.xlu0 %602, %v342
        %v604 = vpop.permute.xlu0 %603
        %v606 = vmul.f32 %v594, %v599
        %v607 = vmul.f32 %v595, %v604
        %608 = vset.pattern.permute.xlu0 1
        %609 = vperm.xlu0 %608, %v341
        %v610 = vpop.permute.xlu0 %609
        %612 = vset.pattern.permute.xlu0 1
        %613 = vperm.xlu0 %612, %v342
        %v614 = vpop.permute.xlu0 %613
        %v616 = vadd.f32 %v606, %v610
        %v617 = vadd.f32 %v607, %v614
        %v618 = vpack.c.bf16 %v616, %v616
        %v619 = vpack.c.bf16 %v617, %v617
        %621 = vset.pattern.permute.xlu0 0
        %622 = vperm.xlu0 %621, %v343
        %v623 = vpop.permute.xlu0 %622
        %v627 = vunpack.c.l.b16 %v618
        %v628 = vunpack.c.l.b16 %v619
        %v629 = vpack.c.b16 %v628, %v627
        %vm631 = vcmask 130048
        %v633 = vsel %vm631, %v344, 0
        %635 = vmatpush.bf16.msra.mxu0 0
        %636 = vmatpush.bf16.msra.mxu0 0
        %637 = vmatpush.bf16.msra.mxu0 0
        %638 = vmatpush.bf16.msra.mxu0 0
        %639 = vmatpush.bf16.msra.mxu0 0
        %640 = vmatpush.bf16.msra.mxu0 0
        %641 = vmatpush.bf16.msra.mxu0 0
        %642 = vmatpush.bf16.msra.mxu0 %v629
        %643 = vmatmul.bf16.gmra.mxu0 %v633
        %v644 = vpop.f32.mrf.mxu0
        %v645 = vadd.f32 %v623, %v644
        %v646 = vpop.f32.mrf.mxu0
        %647 = vdwg.mxu0
        %v648 = vmul.f32 %v645, 0.5
        %v649 = vmul.f32 %v645, 0.70710677
        %v650 = vmul.f32 %v649, %v649
        %v651 = vmin.f32 16.0, %v650
        %v652 = vmul.f32 %v651, 2.1237322e-06
        %v653 = vadd.f32 %v652, 0.00028619796
        %v654 = vmul.f32 %v651, %v653
        %v655 = vadd.f32 %v654, 0.0036580483
        %v656 = vmul.f32 %v651, %v655
        %v657 = vadd.f32 %v656, 0.05243302
        %v658 = vmul.f32 %v651, %v657
        %v659 = vadd.f32 %v658, 0.18741608
        %v660 = vmul.f32 %v651, %v659
        %v661 = vadd.f32 %v660, 1.1283791
        %v662 = vmul.f32 %v649, %v661
        %v663 = vmul.f32 %v651, 3.8918573e-05
        %v664 = vadd.f32 %v663, 0.001143296
        %v665 = vmul.f32 %v651, %v664
        %v666 = vadd.f32 %v665, 0.014752088
        %v667 = vmul.f32 %v651, %v666
        %v668 = vadd.f32 %v667, 0.112945676
        %v669 = vmul.f32 %v651, %v668
        %v670 = vadd.f32 %v669, 0.4994258
        %v671 = vmul.f32 %v651, %v670
        %v672 = vadd.f32 %v671, 1.0
        %v673 = vrcp.pop %v672
        %v674 = vmul.f32 %v672, %v673
        %v675 = vsub.f32 1.0, %v674
        %v676 = vmul.f32 %v673, %v675
        %v677 = vadd.f32 %v673, %v676
        %vm678 = vweird.f32 %v672
        %vm679 = vweird.f32 %v673
        %vm680 = vmor %vm678, %vm679
        %v681 = vsel %vm680, %v673, %v677
        %v682 = vand.u32 2147483647, %v672
        %vm683 = vcmp.eq.f32.partialorder %v682, 8.507059e+37
        %v684 = vand.u32 %v672, 2147483648
        %v685 = vor.u32 1.1754944e-38, %v684
        %v686 = vsel %vm683, %v685, %v681
        %v687 = vmul.f32 %v662, %v686
        %v688 = vmin.f32 %v687, 1.0
        %v689 = vmax.f32 %v688, -1.0
        %v690 = vadd.f32 %v689, 1.0
        %v691 = vmul.f32 %v648, %v690
        %v692 = vpack.c.bf16 %v691, %v691
        %693 = vset.pattern.permute.xlu0 2
        %694 = vperm.xlu0 %693, %v341
        %v695 = vpop.permute.xlu0 %694
        %697 = vset.pattern.permute.xlu0 2
        %698 = vperm.xlu0 %697, %v342
        %v699 = vpop.permute.xlu0 %698
        %v703 = vunpack.c.l.b16 %v345
        %v704 = vunpack.c.l.b16 %v346
        %v705 = vpack.c.b16 %v704, %v703
        %v707 = vsel %vm528, %v705, 0
        %v710 = vsel %vm532, %v692, 0
        %712 = vmatpush.bf16.msra.mxu0 0
        %713 = vmatpush.bf16.msra.mxu0 0
        %714 = vmatpush.bf16.msra.mxu0 0
        %715 = vmatpush.bf16.msra.mxu0 0
        %716 = vmatpush.bf16.msra.mxu0 0
        %717 = vmatpush.bf16.msra.mxu0 0
        %718 = vmatpush.bf16.msra.mxu0 0
        %719 = vmatpush.bf16.msra.mxu0 %v710
        %720 = vmatmul.bf16.gmra.mxu0 %v707
        %v721 = vpop.f32.mrf.mxu0
        %v722 = vadd.f32 %v695, %v721
        %v723 = vpop.f32.mrf.mxu0
        %v724 = vadd.f32 %v699, %v723
        %725 = vdwg.mxu0
        %v726 = vadd.f32 %v550, %v722
        %v727 = vadd.f32 %v551, %v724
        %728 = vst.msk [vmem:[%s325] sm:$0xff] %vm347, %v726
        %729 = vst.msk [vmem:[%s325 + $0x8] sm:$0xff] %vm347, %v727
        %s730 = sand.u32 %s225, 1
        %s731 = scalar_lea.sflag [#allocation3], %s730
        %s732 = sand.u32 %s225, 1
        %s733 = smul.addr %s732, 16
        %s734 = scalar_lea.vmem [#allocation2], %s733
        // Predicated region
        $region57: #{tpu_custom_call.1} parent=55 // pred_check
          %p735 = pneg %p235
        $region58: #{tpu_custom_call.1} parent=55 // pred_check_branch
          %737 = sbr.rel (%p735) target = $region60
        $region59: #{tpu_custom_call.1} parent=55 // pred_region
          %739 = vsyncadd %s731, 0
          %s740 = smul.addr %s23, 2
          %s741 = smul.addr %s740, 8
          %s742 = scalar_lea.hbm %s9, %s741
          %s743 = sshll.u32 %s734, 4
          %s744 = int_to_ptr.vmem [resolvable:$true] %s743
          %s745 = sshll.u32 %s742, 4
          %s746 = int_to_ptr.hbm [resolvable:$true] %s745
          %751 = dma.vmem_to_hbm [thread:$0]  %s744, 256, %s746, %s731, 128, 128, 8
        $region60: #{tpu_custom_call.1} parent=55 // pred_fallthru
          _
      $region56: #{tpu_custom_call.1} parent=5 // pred_fallthru
        _
      %p752 = scmp.le.s32.totalorder 2, %s18
      // Predicated region
      $region61: #{tpu_custom_call.1} parent=5 // pred_check
        %p753 = pneg %p752
      $region62: #{tpu_custom_call.1} parent=5 // pred_check_branch
        %755 = sbr.rel (%p753) target = $region64
      $region63: #{tpu_custom_call.1} parent=5 // pred_region
        %s756 = ssub.s32 %s18, 2
        // Predicated region
        $region65: #{tpu_custom_call.1} parent=63 // pred_check
          %p757 = pneg %p241
        $region66: #{tpu_custom_call.1} parent=63 // pred_check_branch
          %759 = sbr.rel (%p757) target = $region68
        $region67: #{tpu_custom_call.1} parent=63 // pred_region
          %s760 = sand.u32 %s226, 1
          %s761 = scalar_lea.sflag [#allocation3], %s760
          %s762 = sand.u32 %s226, 1
          %s763 = smul.addr %s762, 16
          %s764 = scalar_lea.vmem [#allocation2], %s763
          %766 = dma.done %s761, 256
        $region68: #{tpu_custom_call.1} parent=63 // pred_fallthru
          _
      $region64: #{tpu_custom_call.1} parent=5 // pred_fallthru
        _
    $region6: #{tpu_custom_call.1} parent=1 // loop_footer
      %s22 = sadd.s32 1, %s18
    $region7: #{tpu_custom_call.1} parent=1 // loop_footer_branch
      %17 = sbr.rel target = $region3
    $region8: #{tpu_custom_call.1} parent=1 // loop_exit
      _
    %767 = vsyncpa [#allocation3], 1
    %s768 = scalar_lea.sflag [#allocation3], 1
    %769 = vsyncpa %s768, 1

</llo_original>
